<compile_context>
chip_gen: v6e
topology: v6e:2x2x1
jax: 0.10.0
libtpu: 0.0.40
codegen_flags: <defaults>
</compile_context>

<pallas_src>
import jax
import jax.numpy as jnp
from jax.experimental import pallas as pl
from jax.experimental.pallas import tpu as pltpu


_TILE_CAP = 2048  # rows per grid step at large batch (VMEM use stays < ~2 MiB)


def _mlp_kernel(x_ref, w1_ref, b1_ref, w2_ref, b2_ref, w3_ref, b3_ref, o_ref):
    # fc1 + ReLU: x arrives f32 (single HBM pass); cast to bf16 only for the MXU.
    xb = x_ref[...].astype(jnp.bfloat16)
    h1 = jnp.dot(xb, w1_ref[...], preferred_element_type=jnp.float32)
    h1 = jnp.maximum(h1 + b1_ref[...], 0.0)                       # f32 VPU
    # fc2 + ReLU.
    h2 = jnp.dot(h1.astype(jnp.bfloat16), w2_ref[...],
                 preferred_element_type=jnp.float32)
    h2 = jnp.maximum(h2 + b2_ref[...], 0.0)                       # f32 VPU
    # fc3 as w3_row @ h2^T -> lane-dense (1, tile_b) row.  The M=1 matmul is
    # underfilled, but the MXU is idle in this kernel (DMA/store bound).
    h3 = jax.lax.dot_general(
        w3_ref[...], h2,
        dimension_numbers=(((1,), (1,)), ((), ())),
        preferred_element_type=jnp.float32)                       # (1, tile_b)
    o_ref[...] = (h3 + b3_ref[0, 0]).astype(o_ref.dtype)          # unmasked vst


def _round_up(n, m):
    return (n + m - 1) // m * m


@jax.jit
def car_price_model_forward(x, params):
    """x: (B, D_in) float32. params: dict with w1,b1,w2,b2,w3,b3 (see init_params)."""
    B, d_in = x.shape
    w1, b1 = params["w1"], params["b1"]      # (Din,128) bf16, (1,128) f32
    w2, b2 = params["w2"], params["b2"]      # (128,64) bf16,  (1,64)  f32
    w3, b3 = params["w3"], params["b3"]      # (1,64)   f32,   (1,1)   f32

    # Pad only to the f32 sublane granularity (8 rows), never to a full tile.
    rows = _round_up(max(B, 1), 8)
    if rows != B:
        x = jnp.pad(x, ((0, rows - B), (0, 0)))

    # Tile selection: as large as possible (amortize per-step overhead), but
    # >= 2 tiles when rows >= 16 so both v7x TensorCores get work.
    if rows >= 16:
        tile_b = min(_TILE_CAP, _round_up(pl.cdiv(rows, 2), 8))
    else:
        tile_b = rows
    n_tiles = pl.cdiv(rows, tile_b)

    resident = lambda shape: pl.BlockSpec(shape, lambda i: (0, 0))

    out = pl.pallas_call(
        _mlp_kernel,
        out_shape=jax.ShapeDtypeStruct((n_tiles, tile_b), jnp.float32),
        grid=(n_tiles,),
        in_specs=[
            pl.BlockSpec((tile_b, d_in), lambda i: (i, 0)),        # x: batch-tiled f32
            resident(w1.shape), resident(b1.shape),                # VMEM-resident
            resident(w2.shape), resident(b2.shape),
            resident(w3.shape),
            pl.BlockSpec(memory_space=pltpu.MemorySpace.SMEM),     # b3 scalar
        ],
        out_specs=pl.BlockSpec((1, tile_b), lambda i: (i, 0)),     # lane-dense row
        compiler_params=pltpu.CompilerParams(
            dimension_semantics=("parallel",),
        ),
    )(x, w1, b1, w2, b2, w3, b3)

    # (n_tiles, tile_b) -> (n_tiles*tile_b, 1) is a free metadata reshape;
    # rows past B (tile overhang / sublane pad) are garbage and sliced off.
    return out.reshape(n_tiles * tile_b, 1)[:B]


def init_params(key, input_size):
    """PyTorch nn.Linear-style init (uniform +-1/sqrt(fan_in)).

    w1/w2 are stored bf16 as (in, out) so the kernel computes x @ W on the MXU;
    w3 stays an f32 (1, 64) row (lhs of the fc3 dot_general); biases stay f32.
    """
    def linear(key, fan_in, fan_out):
        kw, kb = jax.random.split(key)
        bound = 1.0 / jnp.sqrt(fan_in)
        w = jax.random.uniform(kw, (fan_in, fan_out), jnp.float32, -bound, bound)
        b = jax.random.uniform(kb, (1, fan_out), jnp.float32, -bound, bound)
        return w, b

    k1, k2, k3 = jax.random.split(key, 3)
    w1, b1 = linear(k1, input_size, 128)
    w2, b2 = linear(k2, 128, 64)
    w3, b3 = linear(k3, 64, 1)
    return {
        "w1": w1.astype(jnp.bfloat16), "b1": b1,
        "w2": w2.astype(jnp.bfloat16), "b2": b2,
        "w3": w3.T,                     # (1, 64) f32 row
        "b3": b3.reshape(1, 1),         # scalar, lives in SMEM
    }


def _reference_forward(x, p):
    """Pure-JAX reference mirroring the kernel math (bf16 MXU operands, f32 acc)."""
    h1 = jnp.dot(x.astype(jnp.bfloat16), p["w1"],
                 preferred_element_type=jnp.float32)
    h1 = jnp.maximum(h1 + p["b1"], 0.0)
    h2 = jnp.dot(h1.astype(jnp.bfloat16), p["w2"],
                 preferred_element_type=jnp.float32)
    h2 = jnp.maximum(h2 + p["b2"], 0.0)
    return jnp.sum(h2 * p["w3"], axis=-1, keepdims=True) + p["b3"]


if __name__ == "__main__":
    key = jax.random.PRNGKey(0)
    k_params, k_x1, k_x2 = jax.random.split(key, 3)

    input_size = 32
    params = init_params(k_params, input_size)

    # Small-shape check (single tile).
    batch = 8
    x = jax.random.normal(k_x1, (batch, input_size), jnp.float32)
    out = jax.block_until_ready(car_price_model_forward(x, params))
    ref = _reference_forward(x, params)
    assert out.shape == (batch, 1), out.shape
    assert jnp.allclose(out, ref, atol=1e-2, rtol=1e-2), "mismatch vs reference (B=8)"

    # Multi-tile path with a partial trailing block (B not a multiple of tile_b).
    batch2 = 600
    x2 = jax.random.normal(k_x2, (batch2, input_size), jnp.float32)
    out2 = jax.block_until_ready(car_price_model_forward(x2, params))
    ref2 = _reference_forward(x2, params)
    assert out2.shape == (batch2, 1), out2.shape
    assert jnp.allclose(out2, ref2, atol=1e-2, rtol=1e-2), "mismatch vs reference (B=600)"

    print("KERNEL_OK")
</pallas_src>

<mosaic_0001>
module attributes {stable_mosaic.version = 11 : i64} {
  func.func @_mlp_kernel(%arg0: i32, %arg1: memref<8x32xf32, #tpu.memory_space<vmem>>, %arg2: memref<32x128xbf16, #tpu.memory_space<vmem>>, %arg3: memref<1x128xf32, #tpu.memory_space<vmem>>, %arg4: memref<128x64xbf16, #tpu.memory_space<vmem>>, %arg5: memref<1x64xf32, #tpu.memory_space<vmem>>, %arg6: memref<1x64xf32, #tpu.memory_space<vmem>>, %arg7: memref<1x1xf32, #tpu.memory_space<smem>>, %arg8: memref<1x8xf32, #tpu.memory_space<vmem>>) attributes {dimension_semantics = [#tpu.dimension_semantics<parallel>], iteration_bounds = array<i64: 1>, scalar_prefetch = 0 : i64, scratch_operands = 0 : i64, tpu.core_type = #tpu.core_type<tc>, window_params = [{transform_indices = @transform_0, window_bounds = array<i64: 8, 32>}, {pipeline_mode = #tpu.pipeline_mode<synchronous>, transform_indices = @transform_1, window_bounds = array<i64: 32, 128>}, {pipeline_mode = #tpu.pipeline_mode<synchronous>, transform_indices = @transform_2, window_bounds = array<i64: 1, 128>}, {pipeline_mode = #tpu.pipeline_mode<synchronous>, transform_indices = @transform_3, window_bounds = array<i64: 128, 64>}, {pipeline_mode = #tpu.pipeline_mode<synchronous>, transform_indices = @transform_4, window_bounds = array<i64: 1, 64>}, {pipeline_mode = #tpu.pipeline_mode<synchronous>, transform_indices = @transform_5, window_bounds = array<i64: 1, 64>}, {transform_indices = @transform_6, window_bounds = array<i64: 1, 1>}, {transform_indices = @transform_7, window_bounds = array<i64: 1, 8>}]} {
    %c0 = arith.constant 0 : index
    %c0_0 = arith.constant 0 : index
    %0 = vector.load %arg1[%c0, %c0_0] : memref<8x32xf32, #tpu.memory_space<vmem>>, vector<8x32xf32>
    %1 = arith.truncf %0 : vector<8x32xf32> to vector<8x32xbf16>
    %c0_1 = arith.constant 0 : index
    %c0_2 = arith.constant 0 : index
    %2 = vector.load %arg2[%c0_1, %c0_2] : memref<32x128xbf16, #tpu.memory_space<vmem>>, vector<32x128xbf16>
    %cst = arith.constant dense<0.000000e+00> : vector<8x128xf32>
    %3 = tpu.matmul %1, %2, %cst {dimension_numbers = #tpu.dot_dimension_numbers<[1], [0], [0], [1], [0, 0, 1, 1], [], []>} : vector<8x32xbf16>, vector<32x128xbf16>, vector<8x128xf32> -> vector<8x128xf32>
    %c0_3 = arith.constant 0 : index
    %c0_4 = arith.constant 0 : index
    %4 = vector.load %arg3[%c0_3, %c0_4] : memref<1x128xf32, #tpu.memory_space<vmem>>, vector<1x128xf32>
    %5 = vector.broadcast %4 : vector<1x128xf32> to vector<8x128xf32>
    %6 = arith.addf %3, %5 : vector<8x128xf32>
    %cst_5 = arith.constant 0.000000e+00 : f32
    %7 = vector.broadcast %cst_5 : f32 to vector<8x128xf32>
    %8 = arith.maximumf %6, %7 : vector<8x128xf32>
    %9 = arith.truncf %8 : vector<8x128xf32> to vector<8x128xbf16>
    %c0_6 = arith.constant 0 : index
    %c0_7 = arith.constant 0 : index
    %10 = vector.load %arg4[%c0_6, %c0_7] : memref<128x64xbf16, #tpu.memory_space<vmem>>, vector<128x64xbf16>
    %cst_8 = arith.constant dense<0.000000e+00> : vector<8x64xf32>
    %11 = tpu.matmul %9, %10, %cst_8 {dimension_numbers = #tpu.dot_dimension_numbers<[1], [0], [0], [1], [0, 0, 1, 1], [], []>} : vector<8x128xbf16>, vector<128x64xbf16>, vector<8x64xf32> -> vector<8x64xf32>
    %c0_9 = arith.constant 0 : index
    %c0_10 = arith.constant 0 : index
    %12 = vector.load %arg5[%c0_9, %c0_10] : memref<1x64xf32, #tpu.memory_space<vmem>>, vector<1x64xf32>
    %13 = vector.broadcast %12 : vector<1x64xf32> to vector<8x64xf32>
    %14 = arith.addf %11, %13 : vector<8x64xf32>
    %cst_11 = arith.constant 0.000000e+00 : f32
    %15 = vector.broadcast %cst_11 : f32 to vector<8x64xf32>
    %16 = arith.maximumf %14, %15 : vector<8x64xf32>
    %c0_12 = arith.constant 0 : index
    %c0_13 = arith.constant 0 : index
    %17 = vector.load %arg6[%c0_12, %c0_13] : memref<1x64xf32, #tpu.memory_space<vmem>>, vector<1x64xf32>
    %cst_14 = arith.constant dense<0.000000e+00> : vector<1x8xf32>
    %18 = tpu.matmul %17, %16, %cst_14 {dimension_numbers = #tpu.dot_dimension_numbers<[1], [1], [0], [0], [0, 0, 1, 0], [], []>} : vector<1x64xf32>, vector<8x64xf32>, vector<1x8xf32> -> vector<1x8xf32>
    %c0_15 = arith.constant 0 : index
    %c0_16 = arith.constant 0 : index
    %19 = memref.load %arg7[%c0_15, %c0_16] : memref<1x1xf32, #tpu.memory_space<smem>>
    %20 = vector.broadcast %19 : f32 to vector<1x8xf32>
    %21 = arith.addf %18, %20 : vector<1x8xf32>
    %c0_17 = arith.constant 0 : index
    %c0_18 = arith.constant 0 : index
    %22 = vector.load %arg8[%c0_17, %c0_18] : memref<1x8xf32, #tpu.memory_space<vmem>>, vector<1x8xf32>
    tpu.vector_store %arg8[%c0_17, %c0_18], %21 {strides = array<i32>} : memref<1x8xf32, #tpu.memory_space<vmem>>, vector<1x8xf32>,
    return
  }
  func.func @transform_0(%arg0: i32) -> (i32, i32) {
    %c0_i32 = arith.constant 0 : i32
    %c0_i32_0 = arith.constant 0 : i32
    return %arg0, %c0_i32 : i32, i32
  }
  func.func @transform_1(%arg0: i32) -> (i32, i32) {
    %c0_i32 = arith.constant 0 : i32
    %c0_i32_0 = arith.constant 0 : i32
    %c0_i32_1 = arith.constant 0 : i32
    return %c0_i32, %c0_i32_0 : i32, i32
  }
  func.func @transform_2(%arg0: i32) -> (i32, i32) {
    %c0_i32 = arith.constant 0 : i32
    %c0_i32_0 = arith.constant 0 : i32
    %c0_i32_1 = arith.constant 0 : i32
    return %c0_i32, %c0_i32_0 : i32, i32
  }
  func.func @transform_3(%arg0: i32) -> (i32, i32) {
    %c0_i32 = arith.constant 0 : i32
    %c0_i32_0 = arith.constant 0 : i32
    %c0_i32_1 = arith.constant 0 : i32
    return %c0_i32, %c0_i32_0 : i32, i32
  }
  func.func @transform_4(%arg0: i32) -> (i32, i32) {
    %c0_i32 = arith.constant 0 : i32
    %c0_i32_0 = arith.constant 0 : i32
    %c0_i32_1 = arith.constant 0 : i32
    return %c0_i32, %c0_i32_0 : i32, i32
  }
  func.func @transform_5(%arg0: i32) -> (i32, i32) {
    %c0_i32 = arith.constant 0 : i32
    %c0_i32_0 = arith.constant 0 : i32
    %c0_i32_1 = arith.constant 0 : i32
    return %c0_i32, %c0_i32_0 : i32, i32
  }
  func.func @transform_6(%arg0: i32) -> (i32, i32) {
    %c0_i32 = arith.constant 0 : i32
    %c0_i32_0 = arith.constant 0 : i32
    %c0_i32_1 = arith.constant 0 : i32
    return %c0_i32, %c0_i32_0 : i32, i32
  }
  func.func @transform_7(%arg0: i32) -> (i32, i32) {
    %c0_i32 = arith.constant 0 : i32
    %c0_i32_0 = arith.constant 0 : i32
    return %arg0, %c0_i32 : i32, i32
  }
}

</mosaic_0001>

<llo_original>
// kernel: car_price_model_forward.1
$region0: #{car_price_model_forward.1}
  #allocation0 [shape = 'u32[]', space=smem, size = 0x4, offset = 0x4, fixed_abs, tag = 'smem constant byte address 0x4 - core index']
  #allocation1 [shape = 'u32[144,128]{1,0:T(1,128)}', space=vmem, size = 0x12000, scoped, tag = 'internal scratch']
  #allocation2 [shape = 'f32[1,1]{1,0:T(1,128)S(6)}', space=smem, size = 0x200, scoped, tag = 'scoped memory for car_price_model_forward.1']
  %s0 = inlined_call_operand.vmem [shape: f32[8,32], index: 0, kind: input, shape index: {}]
  %s1 = inlined_call_operand.vmem [shape: bf16[32,128], index: 1, kind: input, shape index: {}]
  %s2 = inlined_call_operand.vmem [shape: f32[1,128], index: 2, kind: input, shape index: {}]
  %s3 = inlined_call_operand.vmem [shape: bf16[128,64], index: 3, kind: input, shape index: {}]
  %s4 = inlined_call_operand.vmem [shape: f32[1,64], index: 4, kind: input, shape index: {}]
  %s5 = inlined_call_operand.vmem [shape: f32[1,64], index: 5, kind: input, shape index: {}]
  %s6 = inlined_call_operand.<no memory space> [shape: f32[1,1], index: 6, kind: input, shape index: {}]
  %s7 = inlined_call_operand.hbm [shape: f32[1,8], index: 7, kind: output, shape index: {}]
  %s8 = sld [smem:[#allocation0]]
  $region38: #{car_price_model_forward.1} parent=0
    _
  %s10 = ssub.s32 1, %s8
  %s11 = scalar_select 0, %s10, %s8
  %12 = sst [smem:[#allocation2]] %s6
  $region1: #{car_price_model_forward.1} parent=0
    #allocation3 [shape = 'u8[512]{0}', space=vmem, size = 0x400, scoped, tag = 'output window, operand 0, single buffered']
    #allocation4 [shape = 's32[1]{0}', space=sflag, size = 0x4, scoped, tag = 'scoped memory for car_price_model_forward.1']
    %13 = vsyncpa [#allocation4], 0
    // Predicated region
    $region2: #{car_price_model_forward.1} parent=1 // pred_check
      _
    $region3: #{car_price_model_forward.1} parent=1 // pred_check_branch
      %15 = sbr.rel (0) target = $region5
    $region4: #{car_price_model_forward.1} parent=1 // pred_region
      _
    $region5: #{car_price_model_forward.1} parent=1 // pred_fallthru
      _
    // Predicated region
    $region6: #{car_price_model_forward.1} parent=1 // pred_check
      _
    $region7: #{car_price_model_forward.1} parent=1 // pred_check_branch
      %17 = sbr.rel (0) target = $region9
    $region8: #{car_price_model_forward.1} parent=1 // pred_region
      _
    $region9: #{car_price_model_forward.1} parent=1 // pred_fallthru
      _
    // Predicated region
    $region10: #{car_price_model_forward.1} parent=1 // pred_check
      _
    $region11: #{car_price_model_forward.1} parent=1 // pred_check_branch
      %19 = sbr.rel (0) target = $region13
    $region12: #{car_price_model_forward.1} parent=1 // pred_region
      _
    $region13: #{car_price_model_forward.1} parent=1 // pred_fallthru
      _
    // Predicated region
    $region14: #{car_price_model_forward.1} parent=1 // pred_check
      _
    $region15: #{car_price_model_forward.1} parent=1 // pred_check_branch
      %21 = sbr.rel (0) target = $region17
    $region16: #{car_price_model_forward.1} parent=1 // pred_region
      _
    $region17: #{car_price_model_forward.1} parent=1 // pred_fallthru
      _
    // Predicated region
    $region18: #{car_price_model_forward.1} parent=1 // pred_check
      _
    $region19: #{car_price_model_forward.1} parent=1 // pred_check_branch
      %23 = sbr.rel (0) target = $region21
    $region20: #{car_price_model_forward.1} parent=1 // pred_region
      _
    $region21: #{car_price_model_forward.1} parent=1 // pred_fallthru
      _
    // Predicated region
    $region22: #{car_price_model_forward.1} parent=1 // pred_check
      _
    $region23: #{car_price_model_forward.1} parent=1 // pred_check_branch
      %25 = sbr.rel (0) target = $region25
    $region24: #{car_price_model_forward.1} parent=1 // pred_region
      _
    $region25: #{car_price_model_forward.1} parent=1 // pred_fallthru
      _
    // Predicated region
    $region26: #{car_price_model_forward.1} parent=1 // pred_check
      _
    $region27: #{car_price_model_forward.1} parent=1 // pred_check_branch
      %27 = sbr.rel (0) target = $region29
    $region28: #{car_price_model_forward.1} parent=1 // pred_region
      _
    $region29: #{car_price_model_forward.1} parent=1 // pred_fallthru
      _
    %v29 = vld [vmem:[%s0] sm:$0xff]
    %v30 = vpack.c.bf16 %v29, %v29
    %v31 = vld [vmem:[%s1] sm:$0xf]
    %v32 = vld [vmem:[%s1 + $0x4] sm:$0xf]
    %v33 = vld [vmem:[%s1 + $0x8] sm:$0xf]
    %v34 = vld [vmem:[%s1 + $0xc] sm:$0xf]
    %v35 = vld [vmem:[%s2] sm:$0x1]
    %v37 = vlaneseq
    %v38 = vshrl.u32 %v37, 7
    %v39 = vsub.s32 0, %v38
    %v40 = vrot.slane %v35, %v39
    %v46 = vunpack.c.l.b16 %v31
    %v47 = vunpack.c.l.b16 %v32
    %v48 = vunpack.c.l.b16 %v33
    %v49 = vunpack.c.l.b16 %v34
    %v50 = vpack.c.b16 %v47, %v46
    %v51 = vpack.c.b16 %v49, %v48
    %vm54 = vcmask 261120
    %v56 = vsel %vm54, %v30, 0
    %58 = vmatprep.subr.bf16.mxu0 0
    %59 = vmatpush1.bf16.msra.mxu0 0
    %60 = vmatprep.subr.bf16.mxu0 0
    %61 = vmatpush1.bf16.msra.mxu0 0
    %62 = vmatprep.subr.bf16.mxu0 0
    %63 = vmatpush1.bf16.msra.mxu0 0
    %64 = vmatprep.subr.bf16.mxu0 0
    %65 = vmatpush1.bf16.msra.mxu0 0
    %66 = vmatprep.subr.bf16.mxu0 0
    %67 = vmatpush1.bf16.msra.mxu0 0
    %68 = vmatprep.subr.bf16.mxu0 0
    %69 = vmatpush1.bf16.msra.mxu0 0
    %70 = vmatprep.subr.bf16.mxu0 0
    %71 = vmatpush1.bf16.msra.mxu0 %v51
    %72 = vmatprep.subr.bf16.mxu0 0
    %73 = vmatpush1.bf16.msra.mxu0 %v50
    %74 = vmatprep.subr.bf16.mxu0 0
    %75 = vmatpush2.bf16.msra.mxu0 0
    %76 = vmatprep.subr.bf16.mxu0 0
    %77 = vmatpush2.bf16.msra.mxu0 0
    %78 = vmatprep.subr.bf16.mxu0 0
    %79 = vmatpush2.bf16.msra.mxu0 0
    %80 = vmatprep.subr.bf16.mxu0 0
    %81 = vmatpush2.bf16.msra.mxu0 0
    %82 = vmatprep.subr.bf16.mxu0 0
    %83 = vmatpush2.bf16.msra.mxu0 0
    %84 = vmatprep.subr.bf16.mxu0 0
    %85 = vmatpush2.bf16.msra.mxu0 0
    %86 = vmatprep.subr.bf16.mxu0 0
    %87 = vmatpush2.bf16.msra.mxu0 0
    %88 = vmatprep.subr.bf16.mxu0 0
    %89 = vmatpush2.bf16.msra.mxu0 0
    %90 = vmatprep.mubr.bf16.mxu0 0
    %91 = vmatmul.mubr.bf16.gmra.mxu0 %v56
    %v92 = vpop.f32.mrf.mxu0
    %v93 = vadd.f32 %v40, %v92
    %v94 = vpop.f32.mrf.mxu0
    %v95 = vpop.f32.mrf.mxu0
    %v96 = vpop.f32.mrf.mxu0
    %97 = vdwg.mxu0
    %v98 = vmax.f32 %v93, 0.0
    %v99 = vpack.c.bf16 %v98, %v98
    %v100 = vld [vmem:[%s3] sm:$0xf]
    %v101 = vld [vmem:[%s3 + $0x4] sm:$0xf]
    %v102 = vld [vmem:[%s3 + $0x8] sm:$0xf]
    %v103 = vld [vmem:[%s3 + $0xc] sm:$0xf]
    %v104 = vld [vmem:[%s3 + $0x10] sm:$0xf]
    %v105 = vld [vmem:[%s3 + $0x14] sm:$0xf]
    %v106 = vld [vmem:[%s3 + $0x18] sm:$0xf]
    %v107 = vld [vmem:[%s3 + $0x1c] sm:$0xf]
    %v108 = vld [vmem:[%s3 + $0x20] sm:$0xf]
    %v109 = vld [vmem:[%s3 + $0x24] sm:$0xf]
    %v110 = vld [vmem:[%s3 + $0x28] sm:$0xf]
    %v111 = vld [vmem:[%s3 + $0x2c] sm:$0xf]
    %v112 = vld [vmem:[%s3 + $0x30] sm:$0xf]
    %v113 = vld [vmem:[%s3 + $0x34] sm:$0xf]
    %v114 = vld [vmem:[%s3 + $0x38] sm:$0xf]
    %v115 = vld [vmem:[%s3 + $0x3c] sm:$0xf]
    %v116 = vld [vmem:[%s4] sm:$0x1]
    %v118 = vlaneseq
    %v119 = vshrl.u32 %v118, 7
    %v120 = vsub.s32 0, %v119
    %v121 = vrot.slane %v116, %v120
    %v139 = vunpack.c.l.b16 %v100
    %v140 = vunpack.c.l.b16 %v101
    %v141 = vunpack.c.l.b16 %v102
    %v142 = vunpack.c.l.b16 %v103
    %v143 = vunpack.c.l.b16 %v104
    %v144 = vunpack.c.l.b16 %v105
    %v145 = vunpack.c.l.b16 %v106
    %v146 = vunpack.c.l.b16 %v107
    %v147 = vunpack.c.l.b16 %v108
    %v148 = vunpack.c.l.b16 %v109
    %v149 = vunpack.c.l.b16 %v110
    %v150 = vunpack.c.l.b16 %v111
    %v151 = vunpack.c.l.b16 %v112
    %v152 = vunpack.c.l.b16 %v113
    %v153 = vunpack.c.l.b16 %v114
    %v154 = vunpack.c.l.b16 %v115
    %v155 = vpack.c.b16 %v140, %v139
    %v156 = vpack.c.b16 %v142, %v141
    %v157 = vpack.c.b16 %v144, %v143
    %v158 = vpack.c.b16 %v146, %v145
    %v159 = vpack.c.b16 %v148, %v147
    %v160 = vpack.c.b16 %v150, %v149
    %v161 = vpack.c.b16 %v152, %v151
    %v162 = vpack.c.b16 %v154, %v153
    %171 = vmatprep.subr.bf16.mxu0 0
    %172 = vmatpush1.bf16.msra.mxu0 %v162
    %173 = vmatprep.subr.bf16.mxu0 0
    %174 = vmatpush1.bf16.msra.mxu0 %v161
    %175 = vmatprep.subr.bf16.mxu0 0
    %176 = vmatpush1.bf16.msra.mxu0 %v160
    %177 = vmatprep.subr.bf16.mxu0 0
    %178 = vmatpush1.bf16.msra.mxu0 %v159
    %179 = vmatprep.subr.bf16.mxu0 0
    %180 = vmatpush1.bf16.msra.mxu0 %v158
    %181 = vmatprep.subr.bf16.mxu0 0
    %182 = vmatpush1.bf16.msra.mxu0 %v157
    %183 = vmatprep.subr.bf16.mxu0 0
    %184 = vmatpush1.bf16.msra.mxu0 %v156
    %185 = vmatprep.subr.bf16.mxu0 0
    %186 = vmatpush1.bf16.msra.mxu0 %v155
    %187 = vmatprep.subr.bf16.mxu0 0
    %188 = vmatpush2.bf16.msra.mxu0 0
    %189 = vmatprep.subr.bf16.mxu0 0
    %190 = vmatpush2.bf16.msra.mxu0 0
    %191 = vmatprep.subr.bf16.mxu0 0
    %192 = vmatpush2.bf16.msra.mxu0 0
    %193 = vmatprep.subr.bf16.mxu0 0
    %194 = vmatpush2.bf16.msra.mxu0 0
    %195 = vmatprep.subr.bf16.mxu0 0
    %196 = vmatpush2.bf16.msra.mxu0 0
    %197 = vmatprep.subr.bf16.mxu0 0
    %198 = vmatpush2.bf16.msra.mxu0 0
    %199 = vmatprep.subr.bf16.mxu0 0
    %200 = vmatpush2.bf16.msra.mxu0 0
    %201 = vmatprep.subr.bf16.mxu0 0
    %202 = vmatpush2.bf16.msra.mxu0 0
    %203 = vmatprep.mubr.bf16.mxu0 0
    %204 = vmatmul.mubr.bf16.gmra.mxu0 %v99
    %v205 = vpop.f32.mrf.mxu0
    %v206 = vadd.f32 %v121, %v205
    %v207 = vpop.f32.mrf.mxu0
    %v208 = vpop.f32.mrf.mxu0
    %v209 = vpop.f32.mrf.mxu0
    %210 = vdwg.mxu0
    %v211 = vmax.f32 %v206, 0.0
    %v212 = vld [vmem:[%s5] sm:$0x1]
    %s213 = sld [smem:[#allocation2]]
    %v214 = vstv %s213
    %vm215 = vcmask 523264
    %v217 = vsel %vm215, %v212, 0
    %v220 = vsel %vm215, %v211, 0
    %222 = vmatprep.subr.mxu0 0.0
    %223 = vmatpush1.xpose.msra.mxu0 0.0
    %224 = vmatprep.subr.mxu0 0.0
    %225 = vmatpush1.xpose.msra.mxu0 0.0
    %226 = vmatprep.subr.mxu0 0.0
    %227 = vmatpush1.xpose.msra.mxu0 0.0
    %228 = vmatprep.subr.mxu0 0.0
    %229 = vmatpush1.xpose.msra.mxu0 0.0
    %230 = vmatprep.subr.mxu0 0.0
    %231 = vmatpush1.xpose.msra.mxu0 0.0
    %232 = vmatprep.subr.mxu0 0.0
    %233 = vmatpush1.xpose.msra.mxu0 0.0
    %234 = vmatprep.subr.mxu0 0.0
    %235 = vmatpush1.xpose.msra.mxu0 0.0
    %236 = vmatprep.subr.mxu0 0.0
    %237 = vmatpush1.xpose.msra.mxu0 0.0
    %238 = vmatprep.subr.mxu0 0.0
    %239 = vmatpush1.xpose.msra.mxu0 0.0
    %240 = vmatprep.subr.mxu0 0.0
    %241 = vmatpush1.xpose.msra.mxu0 0.0
    %242 = vmatprep.subr.mxu0 0.0
    %243 = vmatpush1.xpose.msra.mxu0 0.0
    %244 = vmatprep.subr.mxu0 0.0
    %245 = vmatpush1.xpose.msra.mxu0 0.0
    %246 = vmatprep.subr.mxu0 0.0
    %247 = vmatpush1.xpose.msra.mxu0 0.0
    %248 = vmatprep.subr.mxu0 0.0
    %249 = vmatpush1.xpose.msra.mxu0 0.0
    %250 = vmatprep.subr.mxu0 0.0
    %251 = vmatpush1.xpose.msra.mxu0 0.0
    %252 = vmatprep.subr.mxu0 0.0
    %253 = vmatpush1.xpose.msra.mxu0 %v220
    %254 = vmatprep.subr.mxu0 0.0
    %255 = vmatpush2.xpose.msra.mxu0 0.0
    %256 = vmatprep.subr.mxu0 0.0
    %257 = vmatpush2.xpose.msra.mxu0 0.0
    %258 = vmatprep.subr.mxu0 0.0
    %259 = vmatpush2.xpose.msra.mxu0 0.0
    %260 = vmatprep.subr.mxu0 0.0
    %261 = vmatpush2.xpose.msra.mxu0 0.0
    %262 = vmatprep.subr.mxu0 0.0
    %263 = vmatpush2.xpose.msra.mxu0 0.0
    %264 = vmatprep.subr.mxu0 0.0
    %265 = vmatpush2.xpose.msra.mxu0 0.0
    %266 = vmatprep.subr.mxu0 0.0
    %267 = vmatpush2.xpose.msra.mxu0 0.0
    %268 = vmatprep.subr.mxu0 0.0
    %269 = vmatpush2.xpose.msra.mxu0 0.0
    %270 = vmatprep.subr.mxu0 0.0
    %271 = vmatpush2.xpose.msra.mxu0 0.0
    %272 = vmatprep.subr.mxu0 0.0
    %273 = vmatpush2.xpose.msra.mxu0 0.0
    %274 = vmatprep.subr.mxu0 0.0
    %275 = vmatpush2.xpose.msra.mxu0 0.0
    %276 = vmatprep.subr.mxu0 0.0
    %277 = vmatpush2.xpose.msra.mxu0 0.0
    %278 = vmatprep.subr.mxu0 0.0
    %279 = vmatpush2.xpose.msra.mxu0 0.0
    %280 = vmatprep.subr.mxu0 0.0
    %281 = vmatpush2.xpose.msra.mxu0 0.0
    %282 = vmatprep.subr.mxu0 0.0
    %283 = vmatpush2.xpose.msra.mxu0 0.0
    %284 = vmatprep.subr.mxu0 0.0
    %285 = vmatpush2.xpose.msra.mxu0 0.0
    %286 = vmatprep.mubr.f32.mxu0 0.0
    %287 = vmatmul.mubr.f32.gmra.mxu0 %v217
    %v288 = vpop.f32.mrf.mxu0
    %v289 = vadd.f32 %v214, %v288
    %v290 = vpop.f32.mrf.mxu0
    %291 = vdwg.mxu0
    %vm292 = vcmask 57344
    %293 = vst.msk [vmem:[#allocation3] sm:$0x1] %vm292, %v289
    // Predicated region
    $region30: #{car_price_model_forward.1} parent=1 // pred_check
      _
    $region31: #{car_price_model_forward.1} parent=1 // pred_check_branch
      %295 = sbr.rel (0) target = $region33
    $region32: #{car_price_model_forward.1} parent=1 // pred_region
      %s297 = ssub.s32 16, 16
      %298 = vsyncadd [#allocation4], %s297
      %s300 = sshll.u32 [#allocation3], 4
      %s301 = int_to_ptr.vmem [resolvable:$true] %s300
      %303 = dma.vmem_to_hbm [thread:$0]  %s301, 16, %s7, [#allocation4]
    $region33: #{car_price_model_forward.1} parent=1 // pred_fallthru
      _
    // Predicated region
    $region34: #{car_price_model_forward.1} parent=1 // pred_check
      _
    $region35: #{car_price_model_forward.1} parent=1 // pred_check_branch
      %305 = sbr.rel (0) target = $region37
    $region36: #{car_price_model_forward.1} parent=1 // pred_region
      %306 = dma.done [#allocation4], 16
    $region37: #{car_price_model_forward.1} parent=1 // pred_fallthru
      _
    %307 = vsyncpa [#allocation4], 1

</llo_original>
